<compile_context>
chip_gen: v6e
topology: v6e:2x2x1
jax: 0.10.0
libtpu: 0.0.40
codegen_flags: <defaults>
</compile_context>

<pallas_src>
import jax
import jax.numpy as jnp
from jax.experimental import pallas as pl
from jax.experimental.pallas import tpu as pltpu

DEGREE = 5           # degree of the polynomial time-weight net
LAMBDA_REG = 0.02    # unused in forward; kept for parity with the module


def _history_repr_kernel(scal_ref, times_ref, q_ref, e_ref, o_ref):
    # scal_ref:  SMEM (DEGREE+2,)  [c0..c5 pre-clamped, current_time]
    # times_ref: VMEM (n, 1)       event_times
    # q_ref:     VMEM (1, d)       Q_base
    # e_ref:     VMEM (n, d)       event_embeddings
    # o_ref:     VMEM (1, d)       h_t

    # --- time weights: sigmoid(Horner(|current_time - t_j|)) ---------------
    ct = scal_ref[DEGREE + 1]                                   # current_time (scalar)
    t = jnp.abs(ct - times_ref[...])                            # (n, 1)
    w = scal_ref[DEGREE - 1] + scal_ref[DEGREE] * t             # scalar-seeded Horner
    for i in range(DEGREE - 2, -1, -1):                         # statically unrolled
        w = scal_ref[i] + w * t
    time_w = pl.reciprocal(1.0 + jnp.exp(-w), approx=False)     # sigmoid, (n, 1)

    # --- time-weighted attention over the history --------------------------
    e = e_ref[...]                                              # (n, d)
    q = q_ref[...]                                              # (1, d)
    scores = jnp.sum(e * q, axis=1, keepdims=True) * time_w     # (n, 1)

    m = jnp.max(scores, axis=0, keepdims=True)                  # stable softmax
    p = jnp.exp(scores - m)
    alpha = p * pl.reciprocal(jnp.sum(p, axis=0, keepdims=True), approx=False)

    o_ref[...] = jnp.sum(alpha * e, axis=0, keepdims=True)      # (1, d)


@jax.jit
def history_representation(event_embeddings, event_times, current_time,
                           q_base, coefficients):
    """Fused forward pass of HistoryRepresentation. Returns h_t of shape [embed_dim]."""
    n, d = event_embeddings.shape

    # Hoisted coefficient clamp (matches the in-place clamp_ before use in forward).
    coef = jnp.clip(coefficients.astype(jnp.float32), -10.0, 10.0)        # (DEGREE+1,)
    ct = jnp.asarray(current_time, jnp.float32).reshape(1)                # (1,)
    scalars = jnp.concatenate([coef, ct])                                 # (DEGREE+2,)
    times2d = event_times.astype(jnp.float32).reshape(n, 1)               # (n, 1)
    q2d = q_base.astype(jnp.float32).reshape(1, d)                        # (1, d)
    e = event_embeddings.astype(jnp.float32)                              # (n, d)

    h = pl.pallas_call(
        _history_repr_kernel,
        out_shape=jax.ShapeDtypeStruct((1, d), jnp.float32),
        grid_spec=pl.GridSpec(
            grid=(1,),
            in_specs=[
                pl.BlockSpec(memory_space=pltpu.SMEM),        # scalars (DEGREE+2,)
                pl.BlockSpec((n, 1), lambda i: (0, 0)),       # event_times
                pl.BlockSpec((1, d), lambda i: (0, 0)),       # Q_base
                pl.BlockSpec((n, d), lambda i: (0, 0)),       # event_embeddings
            ],
            out_specs=pl.BlockSpec((1, d), lambda i: (0, 0)),
        ),
    )(scalars, times2d, q2d, e)

    return h[0]


def _reference(event_embeddings, event_times, current_time, q_base, coefficients):
    """Pure-JAX reference matching the PyTorch forward."""
    c = jnp.clip(coefficients, -10.0, 10.0)
    t = jnp.abs(current_time - event_times)[:, None]            # (n, 1)
    w = jnp.full_like(t, c[DEGREE])
    for i in range(DEGREE - 1, -1, -1):
        w = c[i] + w * t
    time_weights = jax.nn.sigmoid(w)                             # (n, 1)
    attn_scores = event_embeddings @ q_base                      # (n,)
    attn_scores = attn_scores * time_weights[:, 0]
    alpha = jax.nn.softmax(attn_scores, axis=0)
    return jnp.sum(alpha[:, None] * event_embeddings, axis=0)    # (d,)


if __name__ == "__main__":
    key = jax.random.PRNGKey(0)
    k_e, k_t, k_q, k_c = jax.random.split(key, 4)

    N_HISTORY, EMBED_DIM = 8, 32

    # Deterministic small example consistent with the module's forward.
    event_embeddings = jax.random.normal(k_e, (N_HISTORY, EMBED_DIM), dtype=jnp.float32)
    event_times = jax.random.uniform(k_t, (N_HISTORY,), dtype=jnp.float32,
                                     minval=0.0, maxval=10.0)
    current_time = 10.0
    q_base = jax.random.normal(k_q, (EMBED_DIM,), dtype=jnp.float32)          # Q_base param
    coefficients = jax.random.normal(k_c, (DEGREE + 1,), dtype=jnp.float32)   # time-weight net

    h_t = history_representation(event_embeddings, event_times, current_time,
                                 q_base, coefficients)
    h_t = jax.block_until_ready(h_t)

    ref = _reference(event_embeddings, event_times, current_time, q_base, coefficients)
    assert h_t.shape == (EMBED_DIM,)
    assert jnp.allclose(h_t, ref, atol=1e-4, rtol=1e-4), "mismatch vs reference"

    print("KERNEL_OK")
</pallas_src>

<mosaic_0001>
module attributes {stable_mosaic.version = 11 : i64} {
  func.func @_history_repr_kernel(%arg0: i32, %arg1: memref<7xf32, #tpu.memory_space<smem>>, %arg2: memref<8x1xf32, #tpu.memory_space<vmem>>, %arg3: memref<1x32xf32, #tpu.memory_space<vmem>>, %arg4: memref<8x32xf32, #tpu.memory_space<vmem>>, %arg5: memref<1x32xf32, #tpu.memory_space<vmem>>) attributes {dimension_semantics = [#tpu.dimension_semantics<arbitrary>], iteration_bounds = array<i64: 1>, scalar_prefetch = 0 : i64, scratch_operands = 0 : i64, tpu.core_type = #tpu.core_type<tc>, window_params = [{transform_indices = @transform_0, window_bounds = array<i64: 7>}, {pipeline_mode = #tpu.pipeline_mode<synchronous>, transform_indices = @transform_1, window_bounds = array<i64: 8, 1>}, {pipeline_mode = #tpu.pipeline_mode<synchronous>, transform_indices = @transform_2, window_bounds = array<i64: 1, 32>}, {pipeline_mode = #tpu.pipeline_mode<synchronous>, transform_indices = @transform_3, window_bounds = array<i64: 8, 32>}, {pipeline_mode = #tpu.pipeline_mode<synchronous>, transform_indices = @transform_4, window_bounds = array<i64: 1, 32>}]} {
    %c6 = arith.constant 6 : index
    %0 = memref.load %arg1[%c6] : memref<7xf32, #tpu.memory_space<smem>>
    %c0 = arith.constant 0 : index
    %c0_0 = arith.constant 0 : index
    %1 = vector.load %arg2[%c0, %c0_0] : memref<8x1xf32, #tpu.memory_space<vmem>>, vector<8x1xf32>
    %2 = vector.broadcast %0 : f32 to vector<8x1xf32>
    %3 = arith.subf %2, %1 : vector<8x1xf32>
    %4 = math.absf %3 : vector<8x1xf32>
    %c4 = arith.constant 4 : index
    %5 = memref.load %arg1[%c4] : memref<7xf32, #tpu.memory_space<smem>>
    %c5 = arith.constant 5 : index
    %6 = memref.load %arg1[%c5] : memref<7xf32, #tpu.memory_space<smem>>
    %7 = vector.broadcast %6 : f32 to vector<8x1xf32>
    %8 = arith.mulf %7, %4 : vector<8x1xf32>
    %9 = vector.broadcast %5 : f32 to vector<8x1xf32>
    %10 = arith.addf %9, %8 : vector<8x1xf32>
    %c3 = arith.constant 3 : index
    %11 = memref.load %arg1[%c3] : memref<7xf32, #tpu.memory_space<smem>>
    %12 = arith.mulf %10, %4 : vector<8x1xf32>
    %13 = vector.broadcast %11 : f32 to vector<8x1xf32>
    %14 = arith.addf %13, %12 : vector<8x1xf32>
    %c2 = arith.constant 2 : index
    %15 = memref.load %arg1[%c2] : memref<7xf32, #tpu.memory_space<smem>>
    %16 = arith.mulf %14, %4 : vector<8x1xf32>
    %17 = vector.broadcast %15 : f32 to vector<8x1xf32>
    %18 = arith.addf %17, %16 : vector<8x1xf32>
    %c1 = arith.constant 1 : index
    %19 = memref.load %arg1[%c1] : memref<7xf32, #tpu.memory_space<smem>>
    %20 = arith.mulf %18, %4 : vector<8x1xf32>
    %21 = vector.broadcast %19 : f32 to vector<8x1xf32>
    %22 = arith.addf %21, %20 : vector<8x1xf32>
    %c0_1 = arith.constant 0 : index
    %23 = memref.load %arg1[%c0_1] : memref<7xf32, #tpu.memory_space<smem>>
    %24 = arith.mulf %22, %4 : vector<8x1xf32>
    %25 = vector.broadcast %23 : f32 to vector<8x1xf32>
    %26 = arith.addf %25, %24 : vector<8x1xf32>
    %cst = arith.constant 0.000000e+00 : f32
    %27 = vector.broadcast %cst : f32 to vector<8x1xf32>
    %28 = arith.subf %27, %26 : vector<8x1xf32>
    %29 = math.exp %28 : vector<8x1xf32>
    %cst_2 = arith.constant 1.000000e+00 : f32
    %30 = vector.broadcast %cst_2 : f32 to vector<8x1xf32>
    %31 = arith.addf %30, %29 : vector<8x1xf32>
    %32 = tpu.reciprocal %31 : vector<8x1xf32> -> vector<8x1xf32>
    %c0_3 = arith.constant 0 : index
    %c0_4 = arith.constant 0 : index
    %33 = vector.load %arg4[%c0_3, %c0_4] : memref<8x32xf32, #tpu.memory_space<vmem>>, vector<8x32xf32>
    %c0_5 = arith.constant 0 : index
    %c0_6 = arith.constant 0 : index
    %34 = vector.load %arg3[%c0_5, %c0_6] : memref<1x32xf32, #tpu.memory_space<vmem>>, vector<1x32xf32>
    %35 = vector.broadcast %34 : vector<1x32xf32> to vector<8x32xf32>
    %36 = arith.mulf %33, %35 : vector<8x32xf32>
    %cst_7 = arith.constant dense<0.000000e+00> : vector<8xf32>
    %37 = vector.multi_reduction <add>, %36, %cst_7 [1] : vector<8x32xf32> to vector<8xf32>
    %38 = vector.shape_cast %37 : vector<8xf32> to vector<8x1xf32>
    %39 = arith.mulf %38, %32 : vector<8x1xf32>
    %cst_8 = arith.constant dense<0xFF800000> : vector<1xf32>
    %40 = vector.multi_reduction <maximumf>, %39, %cst_8 [0] : vector<8x1xf32> to vector<1xf32>
    %41 = vector.shape_cast %40 : vector<1xf32> to vector<1x1xf32>
    %42 = vector.broadcast %41 : vector<1x1xf32> to vector<8x1xf32>
    %43 = arith.subf %39, %42 : vector<8x1xf32>
    %44 = math.exp %43 : vector<8x1xf32>
    %cst_9 = arith.constant dense<0.000000e+00> : vector<1xf32>
    %45 = vector.multi_reduction <add>, %44, %cst_9 [0] : vector<8x1xf32> to vector<1xf32>
    %46 = vector.shape_cast %45 : vector<1xf32> to vector<1x1xf32>
    %47 = tpu.reciprocal %46 : vector<1x1xf32> -> vector<1x1xf32>
    %48 = vector.broadcast %47 : vector<1x1xf32> to vector<8x1xf32>
    %49 = arith.mulf %44, %48 : vector<8x1xf32>
    %50 = vector.broadcast %49 : vector<8x1xf32> to vector<8x32xf32>
    %51 = arith.mulf %50, %33 : vector<8x32xf32>
    %cst_10 = arith.constant dense<0.000000e+00> : vector<32xf32>
    %52 = vector.multi_reduction <add>, %51, %cst_10 [0] : vector<8x32xf32> to vector<32xf32>
    %53 = vector.shape_cast %52 : vector<32xf32> to vector<1x32xf32>
    %c0_11 = arith.constant 0 : index
    %c0_12 = arith.constant 0 : index
    %54 = vector.load %arg5[%c0_11, %c0_12] : memref<1x32xf32, #tpu.memory_space<vmem>>, vector<1x32xf32>
    tpu.vector_store %arg5[%c0_11, %c0_12], %53 {strides = array<i32>} : memref<1x32xf32, #tpu.memory_space<vmem>>, vector<1x32xf32>,
    return
  }
  func.func @transform_0(%arg0: i32) -> i32 {
    %c0_i32 = arith.constant 0 : i32
    %c0_i32_0 = arith.constant 0 : i32
    return %c0_i32 : i32
  }
  func.func @transform_1(%arg0: i32) -> (i32, i32) {
    %c0_i32 = arith.constant 0 : i32
    %c0_i32_0 = arith.constant 0 : i32
    %c0_i32_1 = arith.constant 0 : i32
    return %c0_i32, %c0_i32_0 : i32, i32
  }
  func.func @transform_2(%arg0: i32) -> (i32, i32) {
    %c0_i32 = arith.constant 0 : i32
    %c0_i32_0 = arith.constant 0 : i32
    %c0_i32_1 = arith.constant 0 : i32
    return %c0_i32, %c0_i32_0 : i32, i32
  }
  func.func @transform_3(%arg0: i32) -> (i32, i32) {
    %c0_i32 = arith.constant 0 : i32
    %c0_i32_0 = arith.constant 0 : i32
    %c0_i32_1 = arith.constant 0 : i32
    return %c0_i32, %c0_i32_0 : i32, i32
  }
  func.func @transform_4(%arg0: i32) -> (i32, i32) {
    %c0_i32 = arith.constant 0 : i32
    %c0_i32_0 = arith.constant 0 : i32
    %c0_i32_1 = arith.constant 0 : i32
    return %c0_i32, %c0_i32_0 : i32, i32
  }
}

</mosaic_0001>

<llo_original>
// kernel: history_representation.1
$region0: #{history_representation.1}
  #allocation0 [shape = 'u32[]', space=smem, size = 0x4, offset = 0x4, fixed_abs, tag = 'smem constant byte address 0x4 - core index']
  #allocation1 [shape = 'u32[144,128]{1,0:T(1,128)}', space=vmem, size = 0x12000, scoped, tag = 'internal scratch']
  %s0 = inlined_call_operand.vmem [shape: f32[7], index: 0, kind: input, shape index: {}]
  %s1 = inlined_call_operand.vmem [shape: f32[8,1], index: 1, kind: input, shape index: {}]
  %s2 = inlined_call_operand.vmem [shape: f32[1,32], index: 2, kind: input, shape index: {}]
  %s3 = inlined_call_operand.vmem [shape: f32[8,32], index: 3, kind: input, shape index: {}]
  %s4 = inlined_call_operand.hbm [shape: f32[1,32], index: 4, kind: output, shape index: {}]
  %s5 = sld [smem:[#allocation0]]
  $region30: #{history_representation.1} parent=0
    _
  %s7 = ssub.s32 1, %s5
  %s8 = scalar_select 0, %s7, %s5
  $region1: #{history_representation.1} parent=0
    #allocation2 [shape = 'u8[512]{0}', space=smem, size = 0x200, scoped, tag = 'input window, operand 0, single buffered']
    #allocation3 [shape = 's32[1]{0}', space=sflag, size = 0x4, scoped, tag = 'scoped memory for history_representation.1']
    #allocation4 [shape = 's32[1]{0}', space=sflag, size = 0x4, scoped, tag = 'scoped memory for history_representation.1']
    #allocation5 [shape = 'u8[512]{0}', space=vmem, size = 0x400, scoped, tag = 'output window, operand 0, single buffered']
    %9 = vsyncpa [#allocation4], 0
    %10 = vsyncpa [#allocation3], 0
    // Predicated region
    $region2: #{history_representation.1} parent=1 // pred_check
      _
    $region3: #{history_representation.1} parent=1 // pred_check_branch
      %12 = sbr.rel (0) target = $region5
    $region4: #{history_representation.1} parent=1 // pred_region
      %s14 = ssub.s32 16, 16
      %15 = vsyncadd [#allocation4], %s14
      %s17 = sshll.u32 %s0, 4
      %s18 = int_to_ptr.vmem [resolvable:$true] %s17
      %20 = dma.vmem_to_smem %s18, 16, [#allocation2], [#allocation4]
    $region5: #{history_representation.1} parent=1 // pred_fallthru
      _
    // Predicated region
    $region6: #{history_representation.1} parent=1 // pred_check
      _
    $region7: #{history_representation.1} parent=1 // pred_check_branch
      %22 = sbr.rel (0) target = $region9
    $region8: #{history_representation.1} parent=1 // pred_region
      _
    $region9: #{history_representation.1} parent=1 // pred_fallthru
      _
    // Predicated region
    $region10: #{history_representation.1} parent=1 // pred_check
      _
    $region11: #{history_representation.1} parent=1 // pred_check_branch
      %24 = sbr.rel (0) target = $region13
    $region12: #{history_representation.1} parent=1 // pred_region
      _
    $region13: #{history_representation.1} parent=1 // pred_fallthru
      _
    // Predicated region
    $region14: #{history_representation.1} parent=1 // pred_check
      _
    $region15: #{history_representation.1} parent=1 // pred_check_branch
      %26 = sbr.rel (0) target = $region17
    $region16: #{history_representation.1} parent=1 // pred_region
      _
    $region17: #{history_representation.1} parent=1 // pred_fallthru
      _
    // Predicated region
    $region18: #{history_representation.1} parent=1 // pred_check
      _
    $region19: #{history_representation.1} parent=1 // pred_check_branch
      %28 = sbr.rel (0) target = $region21
    $region20: #{history_representation.1} parent=1 // pred_region
      %29 = dma.done [#allocation4], 16
    $region21: #{history_representation.1} parent=1 // pred_fallthru
      _
    %30 = sfence
    %s31 = sld [smem:[#allocation2 + $0x6]]
    %v32 = vld [vmem:[%s1] sm:$0xff]
    %v33 = vstv %s31
    %v34 = vsub.f32 %v33, %v32
    %v35 = vand.u32 2147483647, %v34
    %s36 = sld [smem:[#allocation2 + $0x4]]
    %s37 = sld [smem:[#allocation2 + $0x5]]
    %v38 = vstv %s37
    %v39 = vmul.f32 %v38, %v35
    %v40 = vstv %s36
    %v41 = vadd.f32 %v40, %v39
    %s42 = sld [smem:[#allocation2 + $0x3]]
    %v43 = vmul.f32 %v41, %v35
    %v44 = vstv %s42
    %v45 = vadd.f32 %v44, %v43
    %s46 = sld [smem:[#allocation2 + $0x2]]
    %v47 = vmul.f32 %v45, %v35
    %v48 = vstv %s46
    %v49 = vadd.f32 %v48, %v47
    %s50 = sld [smem:[#allocation2 + $0x1]]
    %v51 = vmul.f32 %v49, %v35
    %v52 = vstv %s50
    %v53 = vadd.f32 %v52, %v51
    %s54 = sld [smem:[#allocation2]]
    %v55 = vmul.f32 %v53, %v35
    %v56 = vstv %s54
    %v57 = vadd.f32 %v56, %v55
    %v58 = vsub.f32 0.0, %v57
    %v59 = vmul.f32 %v58, 1.442695
    %v60 = vpow.pop %v59
    %v61 = vadd.f32 %v60, 1.0
    %v62 = vrcp.pop %v61
    %v63 = vld [vmem:[%s3] sm:$0xff]
    %v64 = vld [vmem:[%s2] sm:$0x1]
    %v66 = vlaneseq
    %v67 = vshrl.u32 %v66, 7
    %v68 = vsub.s32 0, %v67
    %v69 = vrot.slane %v64, %v68
    %v71 = vmul.f32 %v63, %v69
    %vm72 = vcmask 261120
    %v73 = vsel %vm72, %v71, 0.0
    %74 = vadd.xlane.f32.xlu0 %v73
    %v75 = vpop.xlane.xlu0 %74
    %v76 = vmul.f32 %v75, %v62
    %vm77 = vcmask 7168
    %v78 = vsel %vm77, %v76, -inf
    %v79 = vrot.slane %v78, 4
    %v80 = vmax.f32 %v78, %v79
    %v81 = vrot.slane %v80, 2
    %v82 = vmax.f32 %v80, %v81
    %v83 = vrot.slane %v82, 1
    %v84 = vmax.f32 %v82, %v83
    %v85 = vsub.f32 %v76, %v84
    %v86 = vmul.f32 %v85, 1.442695
    %v87 = vpow.pop %v86
    %v88 = vsel %vm77, %v87, 0.0
    %v89 = vrot.slane %v88, 4
    %v90 = vadd.f32 %v88, %v89
    %v91 = vrot.slane %v90, 2
    %v92 = vadd.f32 %v90, %v91
    %v93 = vrot.slane %v92, 1
    %v94 = vadd.f32 %v92, %v93
    %v95 = vrcp.pop %v94
    %v96 = vmul.f32 %v87, %v95
    %98 = vset.pattern.permute.xlu0 0
    %99 = vperm.xlu0 %98, %v96
    %v100 = vpop.permute.xlu0 %99
    %v102 = vmul.f32 %v100, %v63
    %v103 = vsel %vm72, %v102, 0.0
    %v104 = vrot.slane %v103, 4
    %v105 = vadd.f32 %v103, %v104
    %v106 = vrot.slane %v105, 2
    %v107 = vadd.f32 %v105, %v106
    %v108 = vrot.slane %v107, 1
    %v109 = vadd.f32 %v107, %v108
    %vm110 = vcmask 253952
    %111 = vst.msk [vmem:[#allocation5] sm:$0x1] %vm110, %v109
    // Predicated region
    $region22: #{history_representation.1} parent=1 // pred_check
      _
    $region23: #{history_representation.1} parent=1 // pred_check_branch
      %113 = sbr.rel (0) target = $region25
    $region24: #{history_representation.1} parent=1 // pred_region
      %s115 = ssub.s32 16, 16
      %116 = vsyncadd [#allocation3], %s115
      %s118 = sshll.u32 [#allocation5], 4
      %s119 = int_to_ptr.vmem [resolvable:$true] %s118
      %121 = dma.vmem_to_hbm [thread:$0]  %s119, 16, %s4, [#allocation3]
    $region25: #{history_representation.1} parent=1 // pred_fallthru
      _
    // Predicated region
    $region26: #{history_representation.1} parent=1 // pred_check
      _
    $region27: #{history_representation.1} parent=1 // pred_check_branch
      %123 = sbr.rel (0) target = $region29
    $region28: #{history_representation.1} parent=1 // pred_region
      %124 = dma.done [#allocation3], 16
    $region29: #{history_representation.1} parent=1 // pred_fallthru
      _
    %125 = vsyncpa [#allocation3], 1
    %126 = vsyncpa [#allocation4], 1

</llo_original>
